<compile_context>
chip_gen: v5e
topology: v5e:2x2
jax: 0.10.0
libtpu: 0.0.40
codegen_flags: <defaults>
</compile_context>

<pallas_src>
import functools
import math
import re

import jax
import jax.numpy as jnp
from jax.experimental import pallas as pl
from jax.experimental.pallas import tpu as pltpu

ALPHA = 0.8
GAMMA = 2.0

_LANES = 128
_SUBLANES = 8
_MAX_TILE_ROWS = 2048          # (2048,128) f32 tile = 1 MiB/input/buffer
_NUM_CORES = 2                 # leading "parallel" axis; harmless on 1-TC chips
_MIN_PALLAS_ELEMENTS = 16384   # below this, fused XLA beats kernel launch cost


def _round_up(x: int, m: int) -> int:
    return (x + m - 1) // m * m


def _tpu_generation() -> int:
    """Best-effort TPU generation from device_kind; 0 if unknown."""
    try:
        kind = jax.devices()[0].device_kind
        m = re.search(r"(\d+)", kind)
        return int(m.group(1)) if m else 0
    except Exception:  # pragma: no cover - defensive
        return 0


def _focal_transform(bce_mean, alpha, gamma):
    return alpha * (1.0 - jnp.exp(-bce_mean)) ** gamma * bce_mean


def _bce_mean_xla(inputs, targets):
    """Small-input / ragged fallback: stable BCE-with-logits mean in XLA."""
    x = inputs.reshape(-1).astype(jnp.float32)
    t = targets.reshape(-1).astype(jnp.float32)
    bce = jnp.maximum(x, 0.0) - x * t + jnp.log1p(jnp.exp(-jnp.abs(x)))
    return jnp.mean(bce)


def _bce_sum_kernel(x_ref, t_ref, out_ref, acc_ref, *,
                    tile_rows, tiles_per_core, row_tiles, rows,
                    needs_mask, bf16_eup):
    """Accumulates the elementwise BCE-with-logits sum of one (tile_rows, 128)
    tile into a vreg-shaped f32 scratch; writes a (1, 128) partial per
    parallel slice at the last reduction step."""

    @pl.when(pl.program_id(1) == 0)
    def _():
        acc_ref[...] = jnp.zeros_like(acc_ref)

    x = x_ref[...]
    xf = x.astype(jnp.float32)
    tf = t_ref[...].astype(jnp.float32)

    # sigmoid + binary_cross_entropy fused, numerically stable:
    #   bce(x, t) = max(x, 0) - t*x + log1p(exp(-|x|))
    if bf16_eup:
        # exp/log1p on the EUP in bf16 (v6e/v7x); accumulation stays f32.
        softplus = jnp.log1p(jnp.exp(-jnp.abs(x).astype(jnp.bfloat16)))
        softplus = softplus.astype(jnp.float32)
    else:
        softplus = jnp.log1p(jnp.exp(-jnp.abs(xf)))
    bce = jnp.maximum(xf, 0.0) - xf * tf + softplus

    def accumulate(vals):
        # (tile_rows,128) -> (tile_rows//8, 8, 128) -> sum over leading axis:
        # pure vreg-wise VPU adds; the cross-lane reduce happens once outside.
        acc_ref[...] += vals.reshape(
            tile_rows // _SUBLANES, _SUBLANES, _LANES).sum(axis=0)

    if needs_mask:
        # Logical block index (unclamped); the DMA index_map clamps to the last
        # real block, so rows at/after `rows` hold garbage and must be masked.
        b = pl.program_id(0) * tiles_per_core + pl.program_id(1)

        @pl.when(b < row_tiles - 1)
        def _():
            accumulate(bce)

        @pl.when(b >= row_tiles - 1)
        def _():
            row = jax.lax.broadcasted_iota(jnp.int32, (tile_rows, _LANES), 0)
            valid = row < (rows - b * tile_rows)
            accumulate(jnp.where(valid, bce, jnp.float32(0.0)))
    else:
        accumulate(bce)

    @pl.when(pl.program_id(1) == pl.num_programs(1) - 1)
    def _():
        # Fold the 8 sublanes here (free XLU work); wrapper only sums 128 lanes.
        out_ref[...] = acc_ref[...].sum(axis=0, keepdims=True)[None]


def focal_loss(inputs: jax.Array, targets: jax.Array,
               alpha: float = ALPHA, gamma: float = GAMMA) -> jax.Array:
    """focal = alpha * (1 - exp(-BCE))**gamma * BCE, with
    BCE = mean(binary_cross_entropy(sigmoid(inputs), targets))."""
    assert inputs.shape == targets.shape
    n = math.prod(inputs.shape)

    # Small or non-lane-aligned inputs: a fused XLA elementwise+reduce is
    # faster than the pipelined pallas_call (and avoids any pad copy).
    if n < _MIN_PALLAS_ELEMENTS or n % _LANES != 0:
        return _focal_transform(_bce_mean_xla(inputs, targets), alpha, gamma)

    # Keep bf16 streams in bf16 (half the HBM bytes); everything else in f32.
    # Dtypes of the two streams are decoupled (targets may be bf16 labels).
    x_dt = jnp.bfloat16 if inputs.dtype == jnp.bfloat16 else jnp.float32
    t_dt = jnp.bfloat16 if targets.dtype == jnp.bfloat16 else jnp.float32

    rows = n // _LANES
    # Free, bitcast-style reshapes (no pad, no extra HBM traffic under jit).
    x = inputs.astype(x_dt).reshape(rows, _LANES)
    t = targets.astype(t_dt).reshape(rows, _LANES)

    # Tiling geometry (all trace-time Python ints). Round tile_rows to the
    # packed sublane multiple (16 for bf16) and shrink it for mid-sized inputs
    # so the 2-entry parallel axis keeps both v7x TensorCores busy.
    sub_mult = 16 if (x_dt == jnp.bfloat16 or t_dt == jnp.bfloat16) else _SUBLANES
    n_parallel = _NUM_CORES
    tile_rows = min(_MAX_TILE_ROWS,
                    _round_up(pl.cdiv(rows, n_parallel), sub_mult))
    row_tiles = pl.cdiv(rows, tile_rows)
    tiles_per_core = pl.cdiv(row_tiles, n_parallel)
    needs_mask = (n_parallel * tiles_per_core * tile_rows) != rows

    # bf16 transcendentals only where the EUP supports bf16 (v6e/v7x) and the
    # data is already bf16 (keeps f32 inputs bit-faithful on every chip).
    bf16_eup = (x_dt == jnp.bfloat16) and _tpu_generation() >= 6

    def in_map(p, i):
        # Clamp so an uneven split never issues a fully out-of-bounds DMA;
        # re-read rows are masked out inside the kernel.
        return (jnp.minimum(p * tiles_per_core + i, row_tiles - 1), 0)

    kernel = functools.partial(
        _bce_sum_kernel,
        tile_rows=tile_rows, tiles_per_core=tiles_per_core,
        row_tiles=row_tiles, rows=rows,
        needs_mask=needs_mask, bf16_eup=bf16_eup)

    partials = pl.pallas_call(
        kernel,
        out_shape=jax.ShapeDtypeStruct((n_parallel, 1, _LANES), jnp.float32),
        grid_spec=pltpu.PrefetchScalarGridSpec(
            num_scalar_prefetch=0,
            grid=(n_parallel, tiles_per_core),
            in_specs=[
                pl.BlockSpec((tile_rows, _LANES), in_map),
                pl.BlockSpec((tile_rows, _LANES), in_map),
            ],
            out_specs=pl.BlockSpec((1, 1, _LANES), lambda p, i: (p, 0, 0)),
            scratch_shapes=[pltpu.VMEM((_SUBLANES, _LANES), jnp.float32)],
        ),
        compiler_params=pltpu.CompilerParams(
            dimension_semantics=("parallel", "arbitrary"),
            vmem_limit_bytes=32 * 1024 * 1024,  # safe on v5e/v6e/v7x
        ),
    )(x, t)

    # Tiny finalization: sum n_parallel*128 partial lane-sums, mean, focal.
    bce_mean = jnp.sum(partials) / jnp.float32(n)
    return _focal_transform(bce_mean, alpha, gamma)


def focal_loss_ref(inputs, targets, alpha=ALPHA, gamma=GAMMA):
    """Pure-jnp reference matching the PyTorch module (sigmoid -> BCE mean ->
    focal transform; F.binary_cross_entropy clamps log terms at -100)."""
    p = jax.nn.sigmoid(inputs.astype(jnp.float32)).reshape(-1)
    t = targets.astype(jnp.float32).reshape(-1)
    log_p = jnp.maximum(jnp.log(p), -100.0)
    log_1mp = jnp.maximum(jnp.log1p(-p), -100.0)
    bce = -jnp.mean(t * log_p + (1.0 - t) * log_1mp)
    return alpha * (1.0 - jnp.exp(-bce)) ** gamma * bce


if __name__ == "__main__":
    key = jax.random.PRNGKey(0)
    k1, k2, k3, k4 = jax.random.split(key, 4)

    f = jax.jit(focal_loss)

    # Case 1: binary-segmentation-style head, exact tiling (no tail mask).
    shape1 = (2, 1, 128, 128)   # 32768 elements
    x1 = jax.random.normal(k1, shape1, dtype=jnp.float32)
    t1 = (jax.random.uniform(k2, shape1) > 0.5).astype(jnp.float32)
    out1 = jax.block_until_ready(f(x1, t1))
    ref1 = focal_loss_ref(x1, t1)
    assert jnp.allclose(out1, ref1, rtol=1e-4, atol=1e-6), (out1, ref1)

    # Case 2: uneven row count -> exercises the in-kernel masked tail branch.
    shape2 = (3, 1, 100, 128)   # 38400 elements, rows=300 not a tile multiple
    x2 = jax.random.normal(k3, shape2, dtype=jnp.float32)
    t2 = (jax.random.uniform(k4, shape2) > 0.5).astype(jnp.float32)
    out2 = jax.block_until_ready(f(x2, t2))
    ref2 = focal_loss_ref(x2, t2)
    assert jnp.allclose(out2, ref2, rtol=1e-4, atol=1e-6), (out2, ref2)

    print("KERNEL_OK")
</pallas_src>

<mosaic_0001>
module attributes {stable_mosaic.version = 11 : i64} {
  func.func @_bce_sum_kernel(%arg0: i32, %arg1: i32, %arg2: memref<128x128xf32, #tpu.memory_space<vmem>>, %arg3: memref<128x128xf32, #tpu.memory_space<vmem>>, %arg4: memref<1x1x128xf32, #tpu.memory_space<vmem>>, %arg5: memref<8x128xf32, #tpu.memory_space<vmem>>) attributes {dimension_semantics = [#tpu.dimension_semantics<parallel>, #tpu.dimension_semantics<arbitrary>], iteration_bounds = array<i64: 2, 1>, scalar_prefetch = 0 : i64, scratch_operands = 1 : i64, tpu.core_type = #tpu.core_type<tc>, window_params = [{transform_indices = @transform_0, window_bounds = array<i64: 128, 128>}, {transform_indices = @transform_1, window_bounds = array<i64: 128, 128>}, {transform_indices = @transform_2, window_bounds = array<i64: 1, 1, 128>}]} {
    %c0_i32 = arith.constant 0 : i32
    %0 = arith.cmpi eq, %arg1, %c0_i32 : i32
    %1 = arith.extui %0 : i1 to i32
    %c0_i32_0 = arith.constant 0 : i32
    %2 = arith.cmpi ne, %1, %c0_i32_0 : i32
    scf.if %2 {
      %cst_12 = arith.constant 0.000000e+00 : f32
      %23 = vector.broadcast %cst_12 : f32 to vector<8x128xf32>
      %c0_13 = arith.constant 0 : index
      %c0_14 = arith.constant 0 : index
      %24 = vector.load %arg5[%c0_13, %c0_14] : memref<8x128xf32, #tpu.memory_space<vmem>>, vector<8x128xf32>
      tpu.vector_store %arg5[%c0_13, %c0_14], %23 {strides = array<i32>} : memref<8x128xf32, #tpu.memory_space<vmem>>, vector<8x128xf32>,
    } else {
    }
    %c0 = arith.constant 0 : index
    %c0_1 = arith.constant 0 : index
    %3 = vector.load %arg2[%c0, %c0_1] : memref<128x128xf32, #tpu.memory_space<vmem>>, vector<128x128xf32>
    %c0_2 = arith.constant 0 : index
    %c0_3 = arith.constant 0 : index
    %4 = vector.load %arg3[%c0_2, %c0_3] : memref<128x128xf32, #tpu.memory_space<vmem>>, vector<128x128xf32>
    %5 = math.absf %3 : vector<128x128xf32>
    %cst = arith.constant 0.000000e+00 : f32
    %6 = vector.broadcast %cst : f32 to vector<128x128xf32>
    %7 = arith.subf %6, %5 : vector<128x128xf32>
    %8 = math.exp %7 : vector<128x128xf32>
    %9 = math.log1p %8 : vector<128x128xf32>
    %cst_4 = arith.constant 0.000000e+00 : f32
    %10 = vector.broadcast %cst_4 : f32 to vector<128x128xf32>
    %11 = arith.maximumf %3, %10 : vector<128x128xf32>
    %12 = arith.mulf %3, %4 : vector<128x128xf32>
    %13 = arith.subf %11, %12 : vector<128x128xf32>
    %14 = arith.addf %13, %9 : vector<128x128xf32>
    %c0_5 = arith.constant 0 : index
    %c0_6 = arith.constant 0 : index
    %15 = vector.load %arg5[%c0_5, %c0_6] : memref<8x128xf32, #tpu.memory_space<vmem>>, vector<8x128xf32>
    %16 = vector.shape_cast %14 : vector<128x128xf32> to vector<16x8x128xf32>
    %cst_7 = arith.constant dense<0.000000e+00> : vector<8x128xf32>
    %17 = vector.multi_reduction <add>, %16, %cst_7 [0] : vector<16x8x128xf32> to vector<8x128xf32>
    %18 = arith.addf %15, %17 : vector<8x128xf32>
    %c0_8 = arith.constant 0 : index
    %c0_9 = arith.constant 0 : index
    %19 = vector.load %arg5[%c0_8, %c0_9] : memref<8x128xf32, #tpu.memory_space<vmem>>, vector<8x128xf32>
    tpu.vector_store %arg5[%c0_8, %c0_9], %18 {strides = array<i32>} : memref<8x128xf32, #tpu.memory_space<vmem>>, vector<8x128xf32>,
    %c0_i32_10 = arith.constant 0 : i32
    %20 = arith.cmpi eq, %arg1, %c0_i32_10 : i32
    %21 = arith.extui %20 : i1 to i32
    %c0_i32_11 = arith.constant 0 : i32
    %22 = arith.cmpi ne, %21, %c0_i32_11 : i32
    scf.if %22 {
      %c0_12 = arith.constant 0 : index
      %c0_13 = arith.constant 0 : index
      %23 = vector.load %arg5[%c0_12, %c0_13] : memref<8x128xf32, #tpu.memory_space<vmem>>, vector<8x128xf32>
      %cst_14 = arith.constant dense<0.000000e+00> : vector<128xf32>
      %24 = vector.multi_reduction <add>, %23, %cst_14 [0] : vector<8x128xf32> to vector<128xf32>
      %25 = vector.shape_cast %24 : vector<128xf32> to vector<1x128xf32>
      %26 = vector.shape_cast %25 : vector<1x128xf32> to vector<1x1x128xf32>
      %c0_15 = arith.constant 0 : index
      %c0_16 = arith.constant 0 : index
      %c0_17 = arith.constant 0 : index
      %27 = vector.load %arg4[%c0_15, %c0_16, %c0_17] : memref<1x1x128xf32, #tpu.memory_space<vmem>>, vector<1x1x128xf32>
      tpu.vector_store %arg4[%c0_15, %c0_16, %c0_17], %26 {strides = array<i32>} : memref<1x1x128xf32, #tpu.memory_space<vmem>>, vector<1x1x128xf32>,
    } else {
    }
    return
  }
  func.func @transform_0(%arg0: i32, %arg1: i32) -> (i32, i32) {
    %c1_i32 = arith.constant 1 : i32
    %0 = arith.muli %arg0, %c1_i32 : i32
    %1 = arith.addi %0, %arg1 : i32
    %c1_i32_0 = arith.constant 1 : i32
    %2 = arith.minsi %1, %c1_i32_0 : i32
    %c0_i32 = arith.constant 0 : i32
    %c0_i32_1 = arith.constant 0 : i32
    return %2, %c0_i32 : i32, i32
  }
  func.func @transform_1(%arg0: i32, %arg1: i32) -> (i32, i32) {
    %c1_i32 = arith.constant 1 : i32
    %0 = arith.muli %arg0, %c1_i32 : i32
    %1 = arith.addi %0, %arg1 : i32
    %c1_i32_0 = arith.constant 1 : i32
    %2 = arith.minsi %1, %c1_i32_0 : i32
    %c0_i32 = arith.constant 0 : i32
    %c0_i32_1 = arith.constant 0 : i32
    return %2, %c0_i32 : i32, i32
  }
  func.func @transform_2(%arg0: i32, %arg1: i32) -> (i32, i32, i32) {
    %c0_i32 = arith.constant 0 : i32
    %c0_i32_0 = arith.constant 0 : i32
    %c0_i32_1 = arith.constant 0 : i32
    return %arg0, %c0_i32, %c0_i32_0 : i32, i32, i32
  }
}

</mosaic_0001>

<llo_original>
// kernel: focal_loss.1
$region0: #{focal_loss.1}
  #allocation0 [shape = 'u32[]', space=smem, size = 0x4, offset = 0x4, fixed_abs, tag = 'smem constant byte address 0x4 - core index']
  #allocation1 [shape = 'u32[72,128]{1,0:T(1,128)}', space=vmem, size = 0x9000, scoped, tag = 'internal scratch']
  #allocation2 [shape = 'f32[8,128]{1,0:T(8,128)}', space=vmem, size = 0x1000, scoped, tag = 'scratch operand']
  %s0 = inlined_call_operand.hbm [shape: f32[256,128], index: 0, kind: input, shape index: {}]
  %s1 = inlined_call_operand.hbm [shape: f32[256,128], index: 1, kind: input, shape index: {}]
  %s2 = inlined_call_operand.vmem [shape: f32[2,1,128], index: 2, kind: output, shape index: {}]
  %s3 = sld [smem:[#allocation0]]
  $region57: #{focal_loss.1} parent=0
    _
  %s5 = ssub.s32 1, %s3
  %s6 = scalar_select 0, %s5, %s3
  $region1: #{focal_loss.1} parent=0
    #allocation3 [shape = 'u8[131072]{0}', space=vmem, size = 0x20000, scoped, tag = 'input window, operand 0']
    #allocation4 [shape = 's32[2]{0}', space=sflag, size = 0x8, scoped, tag = 'scoped memory for focal_loss.1']
    #allocation5 [shape = 'u8[131072]{0}', space=vmem, size = 0x20000, scoped, tag = 'input window, operand 1']
    #allocation6 [shape = 's32[2]{0}', space=sflag, size = 0x8, scoped, tag = 'scoped memory for focal_loss.1']
    %7 = vsyncpa [#allocation4], 0
    %s8 = scalar_lea.sflag [#allocation4], 1
    %9 = vsyncpa %s8, 0
    %10 = vsyncpa [#allocation6], 0
    %s11 = scalar_lea.sflag [#allocation6], 1
    %12 = vsyncpa %s11, 0
    loop: start=0, step=1, limit=4
    $region2: #{focal_loss.1} parent=1 // loop_pre_header
      _
    $region3: #{focal_loss.1} parent=1 // loop_header
      %s14 = sphi 0, %s18
      %p15 = scmp.ge.s32.totalorder %s14, 4
      %s21 = sphi 0, %s33
      %s22 = sphi 0, %s29
      %s23 = sphi 0, %s21
      %s24 = sphi 0, %s22
      %s25 = sphi 0, %s23
      %s26 = sphi 0, %s24
      %s42 = sphi 0, %s44
      %s45 = sphi 0, %s42
      %s46 = sphi 0, %s45
      %s62 = sphi 0, %s46
      %s74 = sphi 0, %s76
      %s77 = sphi 0, %s74
      %s78 = sphi 0, %s77
      %s94 = sphi 0, %s78
      %s100 = sphi 0, %s102
      %s103 = sphi 0, %s100
      %s104 = sphi 0, %s103
      %s120 = sphi 0, %s104
    $region4: #{focal_loss.1} parent=1 // loop_header_branch
      %17 = sbr.rel (%p15) target = $region8
    $region5: #{focal_loss.1} parent=1 // loop_body
      %s19 = ssub.s32 %s14, 1
      %s20 = ssub.s32 %s14, 2
      %s27 = sadd.s32 1, %s22
      %p28 = scmp.ge.s32.totalorder %s27, 1
      %s29 = scalar_select %p28, 0, %s27
      %s30 = sadd.s32 1, %s21
      %s31 = scalar_select %p28, %s30, %s21
      %p32 = scmp.ge.s32.totalorder %s31, 2
      %s33 = scalar_select %p32, 0, %s31
      %s34 = sadd.s32 %s21, %s22
      %p35 = scmp.lt.s32.totalorder %s34, 1
      %s36 = scalar_select %p35, %s34, 1
      %s37 = sadd.s32 %s33, %s29
      %p38 = scmp.lt.s32.totalorder %s37, 1
      %s39 = scalar_select %p38, %s37, 1
      %s40 = ssub.s32 %s36, %s39
      %p41 = scmp.eq.s32.totalorder %s40, 0
      %s43 = sadd.s32 %s42, 1
      %s44 = scalar_select %p41, %s42, %s43
      %p47 = pneg %p41
      %p48 = scmp.eq.s32.totalorder %s14, 1
      %p49 = por %p47, %p48
      %p50 = scmp.ne.s32.totalorder %s42, %s45
      %p51 = scmp.eq.s32.totalorder %s14, 0
      %p52 = por %p50, %p51
      %p53 = scmp.ne.s32.totalorder %s42, %s45
      %p54 = scmp.eq.s32.totalorder %s19, 1
      %p55 = por %p53, %p54
      %p56 = scmp.ne.s32.totalorder %s45, %s46
      %p57 = scmp.eq.s32.totalorder %s19, 0
      %p58 = por %p56, %p57
      %p59 = scmp.ne.s32.totalorder %s45, %s46
      %p60 = scmp.eq.s32.totalorder %s20, 1
      %p61 = por %p59, %p60
      %p63 = scmp.ne.s32.totalorder %s46, %s62
      %p64 = scmp.eq.s32.totalorder %s20, 0
      %p65 = por %p63, %p64
      %s66 = sadd.s32 %s21, %s22
      %p67 = scmp.lt.s32.totalorder %s66, 1
      %s68 = scalar_select %p67, %s66, 1
      %s69 = sadd.s32 %s33, %s29
      %p70 = scmp.lt.s32.totalorder %s69, 1
      %s71 = scalar_select %p70, %s69, 1
      %s72 = ssub.s32 %s68, %s71
      %p73 = scmp.eq.s32.totalorder %s72, 0
      %s75 = sadd.s32 %s74, 1
      %s76 = scalar_select %p73, %s74, %s75
      %p79 = pneg %p73
      %p80 = scmp.eq.s32.totalorder %s14, 1
      %p81 = por %p79, %p80
      %p82 = scmp.ne.s32.totalorder %s74, %s77
      %p83 = scmp.eq.s32.totalorder %s14, 0
      %p84 = por %p82, %p83
      %p85 = scmp.ne.s32.totalorder %s74, %s77
      %p86 = scmp.eq.s32.totalorder %s19, 1
      %p87 = por %p85, %p86
      %p88 = scmp.ne.s32.totalorder %s77, %s78
      %p89 = scmp.eq.s32.totalorder %s19, 0
      %p90 = por %p88, %p89
      %p91 = scmp.ne.s32.totalorder %s77, %s78
      %p92 = scmp.eq.s32.totalorder %s20, 1
      %p93 = por %p91, %p92
      %p95 = scmp.ne.s32.totalorder %s78, %s94
      %p96 = scmp.eq.s32.totalorder %s20, 0
      %p97 = por %p95, %p96
      %s98 = ssub.s32 %s21, %s33
      %p99 = scmp.eq.s32.totalorder %s98, 0
      %s101 = sadd.s32 %s100, 1
      %s102 = scalar_select %p99, %s100, %s101
      %p105 = pneg %p99
      %p106 = scmp.eq.s32.totalorder %s14, 1
      %p107 = por %p105, %p106
      %p108 = scmp.ne.s32.totalorder %s100, %s103
      %p109 = scmp.eq.s32.totalorder %s14, 0
      %p110 = por %p108, %p109
      %p111 = scmp.ne.s32.totalorder %s100, %s103
      %p112 = scmp.eq.s32.totalorder %s19, 1
      %p113 = por %p111, %p112
      %p114 = scmp.ne.s32.totalorder %s103, %s104
      %p115 = scmp.eq.s32.totalorder %s19, 0
      %p116 = por %p114, %p115
      %p117 = scmp.ne.s32.totalorder %s103, %s104
      %p118 = scmp.eq.s32.totalorder %s20, 1
      %p119 = por %p117, %p118
      %p121 = scmp.ne.s32.totalorder %s104, %s120
      %p122 = scmp.eq.s32.totalorder %s20, 0
      %p123 = por %p121, %p122
      %p124 = scmp.le.s32.totalorder 1, %s14
      %p125 = scmp.lt.s32.totalorder %s14, 3
      %p126 = pnand %p124, %p125
      %p127 = pneg %p126
      // Predicated region
      $region9: #{focal_loss.1} parent=5 // pred_check
        _
      $region10: #{focal_loss.1} parent=5 // pred_check_branch
        %129 = sbr.rel (%p126) target = $region12
      $region11: #{focal_loss.1} parent=5 // pred_region
        %s130 = ssub.s32 %s14, 1
      $region12: #{focal_loss.1} parent=5 // pred_fallthru
        _
      %p131 = scmp.lt.s32.totalorder %s14, 2
      // Predicated region
      $region13: #{focal_loss.1} parent=5 // pred_check
        %p132 = pneg %p131
      $region14: #{focal_loss.1} parent=5 // pred_check_branch
        %134 = sbr.rel (%p132) target = $region16
      $region15: #{focal_loss.1} parent=5 // pred_region
        // Predicated region
        $region17: #{focal_loss.1} parent=15 // pred_check
          %p135 = pneg %p52
        $region18: #{focal_loss.1} parent=15 // pred_check_branch
          %137 = sbr.rel (%p135) target = $region20
        $region19: #{focal_loss.1} parent=15 // pred_region
          %s138 = sand.u32 %s42, 1
          %s139 = scalar_lea.sflag [#allocation4], %s138
          %s140 = sand.u32 %s42, 1
          %s141 = smul.addr %s140, 128
          %s142 = scalar_lea.vmem [#allocation3], %s141
          %s143 = sadd.s32 %s21, %s22
          %p144 = scmp.lt.s32.totalorder %s143, 1
          %s145 = scalar_select %p144, %s143, 1
          %s146 = smul.u32 16, %s145
          %148 = vsyncadd %s139, 0
          %s149 = smul.addr %s146, 8
          %s150 = scalar_lea.hbm %s0, %s149
          %s151 = sshll.u32 %s150, 4
          %s152 = int_to_ptr.hbm [resolvable:$true] %s151
          %s153 = sshll.u32 %s142, 4
          %s154 = int_to_ptr.vmem [resolvable:$true] %s153
          %159 = dma.hbm_to_vmem [thread:$0]  %s152, 2048, %s154, %s139, 128, 128, 8
        $region20: #{focal_loss.1} parent=15 // pred_fallthru
          _
        // Predicated region
        $region21: #{focal_loss.1} parent=15 // pred_check
          %p160 = pneg %p84
        $region22: #{focal_loss.1} parent=15 // pred_check_branch
          %162 = sbr.rel (%p160) target = $region24
        $region23: #{focal_loss.1} parent=15 // pred_region
          %s163 = sand.u32 %s74, 1
          %s164 = scalar_lea.sflag [#allocation6], %s163
          %s165 = sand.u32 %s74, 1
          %s166 = smul.addr %s165, 128
          %s167 = scalar_lea.vmem [#allocation5], %s166
          %s168 = sadd.s32 %s21, %s22
          %p169 = scmp.lt.s32.totalorder %s168, 1
          %s170 = scalar_select %p169, %s168, 1
          %s171 = smul.u32 16, %s170
          %173 = vsyncadd %s164, 0
          %s174 = smul.addr %s171, 8
          %s175 = scalar_lea.hbm %s1, %s174
          %s176 = sshll.u32 %s175, 4
          %s177 = int_to_ptr.hbm [resolvable:$true] %s176
          %s178 = sshll.u32 %s167, 4
          %s179 = int_to_ptr.vmem [resolvable:$true] %s178
          %184 = dma.hbm_to_vmem [thread:$0]  %s177, 2048, %s179, %s164, 128, 128, 8
        $region24: #{focal_loss.1} parent=15 // pred_fallthru
          _
      $region16: #{focal_loss.1} parent=5 // pred_fallthru
        _
      %p185 = scmp.le.s32.totalorder 1, %s14
      %p186 = scmp.lt.s32.totalorder %s14, 3
      %p187 = pnand %p185, %p186
      %p188 = pneg %p187
      // Predicated region
      $region25: #{focal_loss.1} parent=5 // pred_check
        _
      $region26: #{focal_loss.1} parent=5 // pred_check_branch
        %190 = sbr.rel (%p187) target = $region28
      $region27: #{focal_loss.1} parent=5 // pred_region
        %s191 = ssub.s32 %s14, 1
        %s192 = sand.u32 %s45, 1
        %s193 = scalar_lea.sflag [#allocation4], %s192
        %s194 = sand.u32 %s45, 1
        %s195 = smul.addr %s194, 128
        %s196 = scalar_lea.vmem [#allocation3], %s195
        // Predicated region
        $region29: #{focal_loss.1} parent=27 // pred_check
          %p197 = pneg %p58
        $region30: #{focal_loss.1} parent=27 // pred_check_branch
          %199 = sbr.rel (%p197) target = $region32
        $region31: #{focal_loss.1} parent=27 // pred_region
          %201 = dma.done %s193, 2048
        $region32: #{focal_loss.1} parent=27 // pred_fallthru
          _
        %s202 = sand.u32 %s77, 1
        %s203 = scalar_lea.sflag [#allocation6], %s202
        %s204 = sand.u32 %s77, 1
        %s205 = smul.addr %s204, 128
        %s206 = scalar_lea.vmem [#allocation5], %s205
        // Predicated region
        $region33: #{focal_loss.1} parent=27 // pred_check
          %p207 = pneg %p90
        $region34: #{focal_loss.1} parent=27 // pred_check_branch
          %209 = sbr.rel (%p207) target = $region36
        $region35: #{focal_loss.1} parent=27 // pred_region
          %211 = dma.done %s203, 2048
        $region36: #{focal_loss.1} parent=27 // pred_fallthru
          _
        %s212 = sand.u32 %s45, 1
        %s213 = scalar_lea.sflag [#allocation4], %s212
        %s214 = sand.u32 %s45, 1
        %s215 = smul.addr %s214, 128
        %s216 = scalar_lea.vmem [#allocation3], %s215
        %p217 = pneg %p58
        %p218 = pneg %p55
        %s219 = sand.u32 %s77, 1
        %s220 = scalar_lea.sflag [#allocation6], %s219
        %s221 = sand.u32 %s77, 1
        %s222 = smul.addr %s221, 128
        %s223 = scalar_lea.vmem [#allocation5], %s222
        %p224 = pneg %p90
        %p225 = pneg %p87
        %p226 = pneg %p116
        %p227 = pneg %p113
        %p228 = scmp.lt.s32.totalorder %s23, 1
        %s229 = scalar_select %p228, %s23, 1
        %s230 = scalar_lea.vmem %s2, %s229
        %s231 = sadd.s32 %s23, %s24
        %p232 = scmp.lt.s32.totalorder %s231, 1
        %s233 = scalar_select %p232, %s231, 1
        %s234 = smul.u32 16, %s233
        %s235 = sadd.s32 %s23, %s24
        %p236 = scmp.lt.s32.totalorder %s235, 1
        %s237 = scalar_select %p236, %s235, 1
        %s238 = smul.u32 16, %s237
        %p239 = scmp.lt.s32.totalorder %s23, 1
        %s240 = scalar_select %p239, %s23, 1
        %s241 = scalar_lea.vmem %s2, %s240
        %p242 = scmp.eq.s32.totalorder %s24, 0
        // Predicated region
        $region37: #{focal_loss.1} parent=27 // pred_check
          %p243 = pneg %p242
        $region38: #{focal_loss.1} parent=27 // pred_check_branch
          %245 = sbr.rel (%p243) target = $region40
        $region39: #{focal_loss.1} parent=27 // pred_region
          %246 = vst [vmem:[#allocation2] sm:$0xff] 0.0
        $region40: #{focal_loss.1} parent=27 // pred_fallthru
          _
        %v247 = vld [vmem:[%s196] sm:$0xff]
        %v248 = vld [vmem:[%s196 + $0x8] sm:$0xff]
        %v249 = vld [vmem:[%s196 + $0x10] sm:$0xff]
        %v250 = vld [vmem:[%s196 + $0x18] sm:$0xff]
        %v251 = vld [vmem:[%s196 + $0x20] sm:$0xff]
        %v252 = vld [vmem:[%s196 + $0x28] sm:$0xff]
        %v253 = vld [vmem:[%s196 + $0x30] sm:$0xff]
        %v254 = vld [vmem:[%s196 + $0x38] sm:$0xff]
        %v255 = vld [vmem:[%s196 + $0x40] sm:$0xff]
        %v256 = vld [vmem:[%s196 + $0x48] sm:$0xff]
        %v257 = vld [vmem:[%s196 + $0x50] sm:$0xff]
        %v258 = vld [vmem:[%s196 + $0x58] sm:$0xff]
        %v259 = vld [vmem:[%s196 + $0x60] sm:$0xff]
        %v260 = vld [vmem:[%s196 + $0x68] sm:$0xff]
        %v261 = vld [vmem:[%s196 + $0x70] sm:$0xff]
        %v262 = vld [vmem:[%s196 + $0x78] sm:$0xff]
        %v263 = vld [vmem:[%s206] sm:$0xff]
        %v264 = vld [vmem:[%s206 + $0x8] sm:$0xff]
        %v265 = vld [vmem:[%s206 + $0x10] sm:$0xff]
        %v266 = vld [vmem:[%s206 + $0x18] sm:$0xff]
        %v267 = vld [vmem:[%s206 + $0x20] sm:$0xff]
        %v268 = vld [vmem:[%s206 + $0x28] sm:$0xff]
        %v269 = vld [vmem:[%s206 + $0x30] sm:$0xff]
        %v270 = vld [vmem:[%s206 + $0x38] sm:$0xff]
        %v271 = vld [vmem:[%s206 + $0x40] sm:$0xff]
        %v272 = vld [vmem:[%s206 + $0x48] sm:$0xff]
        %v273 = vld [vmem:[%s206 + $0x50] sm:$0xff]
        %v274 = vld [vmem:[%s206 + $0x58] sm:$0xff]
        %v275 = vld [vmem:[%s206 + $0x60] sm:$0xff]
        %v276 = vld [vmem:[%s206 + $0x68] sm:$0xff]
        %v277 = vld [vmem:[%s206 + $0x70] sm:$0xff]
        %v278 = vld [vmem:[%s206 + $0x78] sm:$0xff]
        %v279 = vand.u32 2147483647, %v247
        %v280 = vand.u32 2147483647, %v248
        %v281 = vand.u32 2147483647, %v249
        %v282 = vand.u32 2147483647, %v250
        %v283 = vand.u32 2147483647, %v251
        %v284 = vand.u32 2147483647, %v252
        %v285 = vand.u32 2147483647, %v253
        %v286 = vand.u32 2147483647, %v254
        %v287 = vand.u32 2147483647, %v255
        %v288 = vand.u32 2147483647, %v256
        %v289 = vand.u32 2147483647, %v257
        %v290 = vand.u32 2147483647, %v258
        %v291 = vand.u32 2147483647, %v259
        %v292 = vand.u32 2147483647, %v260
        %v293 = vand.u32 2147483647, %v261
        %v294 = vand.u32 2147483647, %v262
        %v295 = vsub.f32 0.0, %v279
        %v296 = vsub.f32 0.0, %v280
        %v297 = vsub.f32 0.0, %v281
        %v298 = vsub.f32 0.0, %v282
        %v299 = vsub.f32 0.0, %v283
        %v300 = vsub.f32 0.0, %v284
        %v301 = vsub.f32 0.0, %v285
        %v302 = vsub.f32 0.0, %v286
        %v303 = vsub.f32 0.0, %v287
        %v304 = vsub.f32 0.0, %v288
        %v305 = vsub.f32 0.0, %v289
        %v306 = vsub.f32 0.0, %v290
        %v307 = vsub.f32 0.0, %v291
        %v308 = vsub.f32 0.0, %v292
        %v309 = vsub.f32 0.0, %v293
        %v310 = vsub.f32 0.0, %v294
        %v311 = vmul.f32 %v295, 1.442695
        %v312 = vpow.pop %v311
        %v313 = vmul.f32 %v296, 1.442695
        %v314 = vpow.pop %v313
        %v315 = vmul.f32 %v297, 1.442695
        %v316 = vpow.pop %v315
        %v317 = vmul.f32 %v298, 1.442695
        %v318 = vpow.pop %v317
        %v319 = vmul.f32 %v299, 1.442695
        %v320 = vpow.pop %v319
        %v321 = vmul.f32 %v300, 1.442695
        %v322 = vpow.pop %v321
        %v323 = vmul.f32 %v301, 1.442695
        %v324 = vpow.pop %v323
        %v325 = vmul.f32 %v302, 1.442695
        %v326 = vpow.pop %v325
        %v327 = vmul.f32 %v303, 1.442695
        %v328 = vpow.pop %v327
        %v329 = vmul.f32 %v304, 1.442695
        %v330 = vpow.pop %v329
        %v331 = vmul.f32 %v305, 1.442695
        %v332 = vpow.pop %v331
        %v333 = vmul.f32 %v306, 1.442695
        %v334 = vpow.pop %v333
        %v335 = vmul.f32 %v307, 1.442695
        %v336 = vpow.pop %v335
        %v337 = vmul.f32 %v308, 1.442695
        %v338 = vpow.pop %v337
        %v339 = vmul.f32 %v309, 1.442695
        %v340 = vpow.pop %v339
        %v341 = vmul.f32 %v310, 1.442695
        %v342 = vpow.pop %v341
        %v343 = vadd.f32 %v312, 1.0
        %v344 = vlog2.pop %v343
        %v345 = vmul.f32 %v344, 0.6931472
        %v346 = vmul.f32 -0.5, %v312
        %v347 = vadd.f32 %v346, 1.0
        %v348 = vmul.f32 %v347, %v312
        %v349 = vand.u32 2147483647, %v312
        %vm350 = vcmp.lt.f32.partialorder %v349, 0.0004427343
        %v351 = vsel %vm350, %v348, %v345
        %v352 = vadd.f32 %v314, 1.0
        %v353 = vlog2.pop %v352
        %v354 = vmul.f32 %v353, 0.6931472
        %v355 = vmul.f32 -0.5, %v314
        %v356 = vadd.f32 %v355, 1.0
        %v357 = vmul.f32 %v356, %v314
        %v358 = vand.u32 2147483647, %v314
        %vm359 = vcmp.lt.f32.partialorder %v358, 0.0004427343
        %v360 = vsel %vm359, %v357, %v354
        %v361 = vadd.f32 %v316, 1.0
        %v362 = vlog2.pop %v361
        %v363 = vmul.f32 %v362, 0.6931472
        %v364 = vmul.f32 -0.5, %v316
        %v365 = vadd.f32 %v364, 1.0
        %v366 = vmul.f32 %v365, %v316
        %v367 = vand.u32 2147483647, %v316
        %vm368 = vcmp.lt.f32.partialorder %v367, 0.0004427343
        %v369 = vsel %vm368, %v366, %v363
        %v370 = vadd.f32 %v318, 1.0
        %v371 = vlog2.pop %v370
        %v372 = vmul.f32 %v371, 0.6931472
        %v373 = vmul.f32 -0.5, %v318
        %v374 = vadd.f32 %v373, 1.0
        %v375 = vmul.f32 %v374, %v318
        %v376 = vand.u32 2147483647, %v318
        %vm377 = vcmp.lt.f32.partialorder %v376, 0.0004427343
        %v378 = vsel %vm377, %v375, %v372
        %v379 = vadd.f32 %v320, 1.0
        %v380 = vlog2.pop %v379
        %v381 = vmul.f32 %v380, 0.6931472
        %v382 = vmul.f32 -0.5, %v320
        %v383 = vadd.f32 %v382, 1.0
        %v384 = vmul.f32 %v383, %v320
        %v385 = vand.u32 2147483647, %v320
        %vm386 = vcmp.lt.f32.partialorder %v385, 0.0004427343
        %v387 = vsel %vm386, %v384, %v381
        %v388 = vadd.f32 %v322, 1.0
        %v389 = vlog2.pop %v388
        %v390 = vmul.f32 %v389, 0.6931472
        %v391 = vmul.f32 -0.5, %v322
        %v392 = vadd.f32 %v391, 1.0
        %v393 = vmul.f32 %v392, %v322
        %v394 = vand.u32 2147483647, %v322
        %vm395 = vcmp.lt.f32.partialorder %v394, 0.0004427343
        %v396 = vsel %vm395, %v393, %v390
        %v397 = vadd.f32 %v324, 1.0
        %v398 = vlog2.pop %v397
        %v399 = vmul.f32 %v398, 0.6931472
        %v400 = vmul.f32 -0.5, %v324
        %v401 = vadd.f32 %v400, 1.0
        %v402 = vmul.f32 %v401, %v324
        %v403 = vand.u32 2147483647, %v324
        %vm404 = vcmp.lt.f32.partialorder %v403, 0.0004427343
        %v405 = vsel %vm404, %v402, %v399
        %v406 = vadd.f32 %v326, 1.0
        %v407 = vlog2.pop %v406
        %v408 = vmul.f32 %v407, 0.6931472
        %v409 = vmul.f32 -0.5, %v326
        %v410 = vadd.f32 %v409, 1.0
        %v411 = vmul.f32 %v410, %v326
        %v412 = vand.u32 2147483647, %v326
        %vm413 = vcmp.lt.f32.partialorder %v412, 0.0004427343
        %v414 = vsel %vm413, %v411, %v408
        %v415 = vadd.f32 %v328, 1.0
        %v416 = vlog2.pop %v415
        %v417 = vmul.f32 %v416, 0.6931472
        %v418 = vmul.f32 -0.5, %v328
        %v419 = vadd.f32 %v418, 1.0
        %v420 = vmul.f32 %v419, %v328
        %v421 = vand.u32 2147483647, %v328
        %vm422 = vcmp.lt.f32.partialorder %v421, 0.0004427343
        %v423 = vsel %vm422, %v420, %v417
        %v424 = vadd.f32 %v330, 1.0
        %v425 = vlog2.pop %v424
        %v426 = vmul.f32 %v425, 0.6931472
        %v427 = vmul.f32 -0.5, %v330
        %v428 = vadd.f32 %v427, 1.0
        %v429 = vmul.f32 %v428, %v330
        %v430 = vand.u32 2147483647, %v330
        %vm431 = vcmp.lt.f32.partialorder %v430, 0.0004427343
        %v432 = vsel %vm431, %v429, %v426
        %v433 = vadd.f32 %v332, 1.0
        %v434 = vlog2.pop %v433
        %v435 = vmul.f32 %v434, 0.6931472
        %v436 = vmul.f32 -0.5, %v332
        %v437 = vadd.f32 %v436, 1.0
        %v438 = vmul.f32 %v437, %v332
        %v439 = vand.u32 2147483647, %v332
        %vm440 = vcmp.lt.f32.partialorder %v439, 0.0004427343
        %v441 = vsel %vm440, %v438, %v435
        %v442 = vadd.f32 %v334, 1.0
        %v443 = vlog2.pop %v442
        %v444 = vmul.f32 %v443, 0.6931472
        %v445 = vmul.f32 -0.5, %v334
        %v446 = vadd.f32 %v445, 1.0
        %v447 = vmul.f32 %v446, %v334
        %v448 = vand.u32 2147483647, %v334
        %vm449 = vcmp.lt.f32.partialorder %v448, 0.0004427343
        %v450 = vsel %vm449, %v447, %v444
        %v451 = vadd.f32 %v336, 1.0
        %v452 = vlog2.pop %v451
        %v453 = vmul.f32 %v452, 0.6931472
        %v454 = vmul.f32 -0.5, %v336
        %v455 = vadd.f32 %v454, 1.0
        %v456 = vmul.f32 %v455, %v336
        %v457 = vand.u32 2147483647, %v336
        %vm458 = vcmp.lt.f32.partialorder %v457, 0.0004427343
        %v459 = vsel %vm458, %v456, %v453
        %v460 = vadd.f32 %v338, 1.0
        %v461 = vlog2.pop %v460
        %v462 = vmul.f32 %v461, 0.6931472
        %v463 = vmul.f32 -0.5, %v338
        %v464 = vadd.f32 %v463, 1.0
        %v465 = vmul.f32 %v464, %v338
        %v466 = vand.u32 2147483647, %v338
        %vm467 = vcmp.lt.f32.partialorder %v466, 0.0004427343
        %v468 = vsel %vm467, %v465, %v462
        %v469 = vadd.f32 %v340, 1.0
        %v470 = vlog2.pop %v469
        %v471 = vmul.f32 %v470, 0.6931472
        %v472 = vmul.f32 -0.5, %v340
        %v473 = vadd.f32 %v472, 1.0
        %v474 = vmul.f32 %v473, %v340
        %v475 = vand.u32 2147483647, %v340
        %vm476 = vcmp.lt.f32.partialorder %v475, 0.0004427343
        %v477 = vsel %vm476, %v474, %v471
        %v478 = vadd.f32 %v342, 1.0
        %v479 = vlog2.pop %v478
        %v480 = vmul.f32 %v479, 0.6931472
        %v481 = vmul.f32 -0.5, %v342
        %v482 = vadd.f32 %v481, 1.0
        %v483 = vmul.f32 %v482, %v342
        %v484 = vand.u32 2147483647, %v342
        %vm485 = vcmp.lt.f32.partialorder %v484, 0.0004427343
        %v486 = vsel %vm485, %v483, %v480
        %v487 = vmax.f32 %v247, 0.0
        %v488 = vmax.f32 %v248, 0.0
        %v489 = vmax.f32 %v249, 0.0
        %v490 = vmax.f32 %v250, 0.0
        %v491 = vmax.f32 %v251, 0.0
        %v492 = vmax.f32 %v252, 0.0
        %v493 = vmax.f32 %v253, 0.0
        %v494 = vmax.f32 %v254, 0.0
        %v495 = vmax.f32 %v255, 0.0
        %v496 = vmax.f32 %v256, 0.0
        %v497 = vmax.f32 %v257, 0.0
        %v498 = vmax.f32 %v258, 0.0
        %v499 = vmax.f32 %v259, 0.0
        %v500 = vmax.f32 %v260, 0.0
        %v501 = vmax.f32 %v261, 0.0
        %v502 = vmax.f32 %v262, 0.0
        %v503 = vmul.f32 %v247, %v263
        %v504 = vmul.f32 %v248, %v264
        %v505 = vmul.f32 %v249, %v265
        %v506 = vmul.f32 %v250, %v266
        %v507 = vmul.f32 %v251, %v267
        %v508 = vmul.f32 %v252, %v268
        %v509 = vmul.f32 %v253, %v269
        %v510 = vmul.f32 %v254, %v270
        %v511 = vmul.f32 %v255, %v271
        %v512 = vmul.f32 %v256, %v272
        %v513 = vmul.f32 %v257, %v273
        %v514 = vmul.f32 %v258, %v274
        %v515 = vmul.f32 %v259, %v275
        %v516 = vmul.f32 %v260, %v276
        %v517 = vmul.f32 %v261, %v277
        %v518 = vmul.f32 %v262, %v278
        %v519 = vsub.f32 %v487, %v503
        %v520 = vsub.f32 %v488, %v504
        %v521 = vsub.f32 %v489, %v505
        %v522 = vsub.f32 %v490, %v506
        %v523 = vsub.f32 %v491, %v507
        %v524 = vsub.f32 %v492, %v508
        %v525 = vsub.f32 %v493, %v509
        %v526 = vsub.f32 %v494, %v510
        %v527 = vsub.f32 %v495, %v511
        %v528 = vsub.f32 %v496, %v512
        %v529 = vsub.f32 %v497, %v513
        %v530 = vsub.f32 %v498, %v514
        %v531 = vsub.f32 %v499, %v515
        %v532 = vsub.f32 %v500, %v516
        %v533 = vsub.f32 %v501, %v517
        %v534 = vsub.f32 %v502, %v518
        %v535 = vadd.f32 %v519, %v351
        %v536 = vadd.f32 %v520, %v360
        %v537 = vadd.f32 %v521, %v369
        %v538 = vadd.f32 %v522, %v378
        %v539 = vadd.f32 %v523, %v387
        %v540 = vadd.f32 %v524, %v396
        %v541 = vadd.f32 %v525, %v405
        %v542 = vadd.f32 %v526, %v414
        %v543 = vadd.f32 %v527, %v423
        %v544 = vadd.f32 %v528, %v432
        %v545 = vadd.f32 %v529, %v441
        %v546 = vadd.f32 %v530, %v450
        %v547 = vadd.f32 %v531, %v459
        %v548 = vadd.f32 %v532, %v468
        %v549 = vadd.f32 %v533, %v477
        %v550 = vadd.f32 %v534, %v486
        %v551 = vld [vmem:[#allocation2] sm:$0xff]
        %v552 = vadd.f32 %v535, %v536
        %v553 = vadd.f32 %v552, %v537
        %v554 = vadd.f32 %v553, %v538
        %v555 = vadd.f32 %v554, %v539
        %v556 = vadd.f32 %v555, %v540
        %v557 = vadd.f32 %v556, %v541
        %v558 = vadd.f32 %v557, %v542
        %v559 = vadd.f32 %v558, %v543
        %v560 = vadd.f32 %v559, %v544
        %v561 = vadd.f32 %v560, %v545
        %v562 = vadd.f32 %v561, %v546
        %v563 = vadd.f32 %v562, %v547
        %v564 = vadd.f32 %v563, %v548
        %v565 = vadd.f32 %v564, %v549
        %v566 = vadd.f32 %v565, %v550
        %v567 = vadd.f32 %v551, %v566
        %568 = vst [vmem:[#allocation2] sm:$0xff] %v567
        // Predicated region
        $region41: #{focal_loss.1} parent=27 // pred_check
          %p569 = pneg %p242
        $region42: #{focal_loss.1} parent=27 // pred_check_branch
          %571 = sbr.rel (%p569) target = $region44
        $region43: #{focal_loss.1} parent=27 // pred_region
          %v572 = vld [vmem:[#allocation2] sm:$0xff]
          %v573 = vrot.slane %v572, 4
          %v574 = vadd.f32 %v572, %v573
          %v575 = vrot.slane %v574, 2
          %v576 = vadd.f32 %v574, %v575
          %v577 = vrot.slane %v576, 1
          %v578 = vadd.f32 %v576, %v577
          %579 = vst [vmem:[%s241] sm:$0x1] %v578
        $region44: #{focal_loss.1} parent=27 // pred_fallthru
          _
        %p580 = scmp.lt.s32.totalorder %s23, 1
        %s581 = scalar_select %p580, %s23, 1
        %s582 = scalar_lea.vmem %s2, %s581
        // Predicated region
        $region45: #{focal_loss.1} parent=27 // pred_check
          %p583 = pneg %p113
        $region46: #{focal_loss.1} parent=27 // pred_check_branch
          %585 = sbr.rel (%p583) target = $region48
        $region47: #{focal_loss.1} parent=27 // pred_region
          _
        $region48: #{focal_loss.1} parent=27 // pred_fallthru
          _
      $region28: #{focal_loss.1} parent=5 // pred_fallthru
        _
      %p586 = scmp.le.s32.totalorder 2, %s14
      // Predicated region
      $region49: #{focal_loss.1} parent=5 // pred_check
        %p587 = pneg %p586
      $region50: #{focal_loss.1} parent=5 // pred_check_branch
        %589 = sbr.rel (%p587) target = $region52
      $region51: #{focal_loss.1} parent=5 // pred_region
        %s590 = ssub.s32 %s14, 2
        // Predicated region
        $region53: #{focal_loss.1} parent=51 // pred_check
          %p591 = pneg %p119
        $region54: #{focal_loss.1} parent=51 // pred_check_branch
          %593 = sbr.rel (%p591) target = $region56
        $region55: #{focal_loss.1} parent=51 // pred_region
          %p594 = scmp.lt.s32.totalorder %s25, 1
          %s595 = scalar_select %p594, %s25, 1
          %s596 = scalar_lea.vmem %s2, %s595
        $region56: #{focal_loss.1} parent=51 // pred_fallthru
          _
      $region52: #{focal_loss.1} parent=5 // pred_fallthru
        _
    $region6: #{focal_loss.1} parent=1 // loop_footer
      %s18 = sadd.s32 1, %s14
    $region7: #{focal_loss.1} parent=1 // loop_footer_branch
      %13 = sbr.rel target = $region3
    $region8: #{focal_loss.1} parent=1 // loop_exit
      _
    %597 = vsyncpa [#allocation4], 1
    %s598 = scalar_lea.sflag [#allocation4], 1
    %599 = vsyncpa %s598, 1
    %600 = vsyncpa [#allocation6], 1
    %s601 = scalar_lea.sflag [#allocation6], 1
    %602 = vsyncpa %s601, 1

</llo_original>
